<compile_context>
chip_gen: v5e
topology: v5e:2x2
jax: 0.10.0
libtpu: 0.0.40
codegen_flags: <defaults>
</compile_context>

<pallas_src>
import jax
import jax.numpy as jnp
from jax import lax
from jax.experimental import pallas as pl
from jax.experimental.pallas import tpu as pltpu


def _make_harmonic_kernel(single_step: bool):
    """x_ref: (TB, TD) samples; s_ref: (g, TD) scaled selector; o_ref: (g, TB) f32.

    o_ref's block index is constant along grid axis 1 (the dim-reduction axis),
    so it stays resident in VMEM and acts as the accumulator.
    """

    def kernel(x_ref, s_ref, o_ref):
        x = x_ref[...].astype(jnp.float32)      # upcast in-register (VPU slack)
        sq = x * x
        # (g, TD) . (TB, TD)^T -> (g, TB): lane-axis reduction on the MXU; the
        # result has the batch axis on lanes -> lane-dense output stores.
        part = lax.dot_general(
            s_ref[...], sq,
            dimension_numbers=(((1,), (1,)), ((), ())),
            preferred_element_type=jnp.float32,
        )
        if single_step:
            o_ref[...] = part                   # no RMW, no branch
        else:
            kk = pl.program_id(1)

            @pl.when(kk == 0)
            def _init():
                o_ref[...] = part

            @pl.when(kk > 0)
            def _acc():
                o_ref[...] += part

    return kernel


def harmonic_energy(x: jax.Array, k: float = 1.0) -> jax.Array:
    """0.5 * k * sum(x^2, axis=-1) via a Pallas TPU kernel.

    Matches HarmonicEnergy.forward semantics: 1-D inputs are promoted to
    (1, dim); (batch, *dims) reduces over the last axis -> shape x.shape[:-1].
    """
    if x.ndim == 1:
        x = x[None, :]
    lead_shape = x.shape[:-1]
    out_dtype = x.dtype
    D = x.shape[-1]
    x2d = x.reshape((-1, D))
    B = x2d.shape[0]

    # --- lane packing for small feature dims (dim divides 128) -------------
    g = 128 // D if (D <= 128 and 128 % D == 0) else 1
    if g > 1:
        B_pad = pl.cdiv(B, g) * g
        if B_pad != B:
            x2d = jnp.pad(x2d, ((0, B_pad - B), (0, 0)))   # zero rows -> E = 0
        x2d = x2d.reshape((B_pad // g, g * D))
    Bp, W = x2d.shape                      # packed row count / packed row width

    # --- dim-axis tiling (reduction axis, only for very wide rows) ---------
    MAX_TD = 2048
    if W > MAX_TD:
        TD = MAX_TD
        W_pad = pl.cdiv(W, TD) * TD
        if W_pad != W:
            x2d = jnp.pad(x2d, ((0, 0), (0, W_pad - W)))   # zero cols add 0 energy
        W = W_pad
    else:
        TD = W
    n_d = W // TD

    # --- batch-axis tiling ---------------------------------------------------
    itemsize = x2d.dtype.itemsize
    budget = 8 << 20                                    # bytes per input buffer
    tb_cap = (budget // (TD * itemsize)) // 128 * 128   # multiple of 128 (lane-dense out)
    tb_cap = max(128, min(16384, tb_cap))
    if Bp <= tb_cap:
        TB, n_b = Bp, 1                    # single tile: "full dim" layout exemption
    else:
        TB, n_b = tb_cap, pl.cdiv(Bp, tb_cap)   # partial last tile: garbage rows only
                                                 # feed garbage outputs, sliced away below

    # selector S[j, l] = 0.5*k if lane l belongs to packed sample-group j else 0
    lane_group = (jnp.arange(TD, dtype=jnp.int32) // D) if g > 1 \
        else jnp.zeros((TD,), jnp.int32)
    sel = (lane_group[None, :] == jnp.arange(g, dtype=jnp.int32)[:, None])
    sel = sel.astype(jnp.float32) * (0.5 * float(k))

    out = pl.pallas_call(
        _make_harmonic_kernel(single_step=(n_d == 1)),
        out_shape=jax.ShapeDtypeStruct((g, n_b * TB), jnp.float32),
        grid_spec=pltpu.PrefetchScalarGridSpec(
            num_scalar_prefetch=0,
            grid=(n_b, n_d),                       # reduction axis last
            in_specs=[
                pl.BlockSpec((TB, TD), lambda i, j: (i, j)),
                pl.BlockSpec((g, TD), lambda i, j: (0, 0)),
            ],
            out_specs=pl.BlockSpec((g, TB), lambda i, j: (0, i)),
        ),
        compiler_params=pltpu.CompilerParams(
            dimension_semantics=("parallel", "arbitrary"),
            vmem_limit_bytes=32 << 20,
        ),
        cost_estimate=pl.CostEstimate(
            flops=3 * B * D,
            transcendentals=0,
            bytes_accessed=B * D * itemsize + B * 4,
        ),
    )(x2d, sel)

    # out[j, i] = energy of sample i*g + j  ->  transpose+ravel restores order.
    energy = out.T.reshape(-1)[:B].astype(out_dtype)
    return energy.reshape(lead_shape)


if __name__ == "__main__":
    key = jax.random.PRNGKey(0)
    k = 1.5

    # primary small case (batch=2, dim=16), as the module implies
    x = jax.random.normal(key, (2, 16), dtype=jnp.float32)
    e = harmonic_energy(x, k=k)
    jax.block_until_ready(e)
    e_ref = 0.5 * k * jnp.sum(x * x, axis=-1)
    assert e.shape == (2,), e.shape
    assert jnp.allclose(e, e_ref, rtol=1e-4, atol=1e-4), (e, e_ref)

    # 1-D promotion path (like the PyTorch module)
    e1 = harmonic_energy(x[0], k=k)
    jax.block_until_ready(e1)
    assert e1.shape == (1,)
    assert jnp.allclose(e1[0], e_ref[0], rtol=1e-4, atol=1e-4)

    # extra leading dims: reduce only over the last axis
    x3 = jax.random.normal(jax.random.PRNGKey(1), (2, 4, 16), dtype=jnp.float32)
    e3 = harmonic_energy(x3, k=k)
    jax.block_until_ready(e3)
    assert e3.shape == (2, 4)
    assert jnp.allclose(e3, 0.5 * k * jnp.sum(x3 * x3, axis=-1), rtol=1e-4, atol=1e-4)

    # packed + multi-batch-tile path (partial last tile)
    xb = jax.random.normal(jax.random.PRNGKey(2), (140000, 16), dtype=jnp.float32)
    eb = harmonic_energy(xb, k=k)
    jax.block_until_ready(eb)
    assert jnp.allclose(eb, 0.5 * k * jnp.sum(xb * xb, axis=-1), rtol=1e-4, atol=1e-4)

    # non-packable dim + multi-batch-tile path
    xn = jax.random.normal(jax.random.PRNGKey(3), (20000, 20), dtype=jnp.float32)
    en = harmonic_energy(xn, k=k)
    jax.block_until_ready(en)
    assert jnp.allclose(en, 0.5 * k * jnp.sum(xn * xn, axis=-1), rtol=1e-4, atol=1e-4)

    # wide-dim path: reduction-axis grid with resident-output accumulation
    xw = jax.random.normal(jax.random.PRNGKey(4), (4, 3000), dtype=jnp.float32)
    ew = harmonic_energy(xw, k=k)
    jax.block_until_ready(ew)
    assert jnp.allclose(ew, 0.5 * k * jnp.sum(xw * xw, axis=-1), rtol=1e-4, atol=1e-4)

    # bf16 input path (dtype preserved, f32 accumulation inside the kernel)
    xh = jax.random.normal(jax.random.PRNGKey(5), (1024, 64), dtype=jnp.bfloat16)
    eh = harmonic_energy(xh, k=k)
    jax.block_until_ready(eh)
    ref_h = 0.5 * k * jnp.sum(xh.astype(jnp.float32) ** 2, axis=-1)
    assert eh.dtype == jnp.bfloat16
    assert jnp.allclose(eh.astype(jnp.float32), ref_h, rtol=2e-2, atol=2e-2)

    print("KERNEL_OK")
</pallas_src>

<mosaic_0001>
module attributes {stable_mosaic.version = 11 : i64} {
  func.func @kernel(%arg0: i32, %arg1: i32, %arg2: memref<1x128xf32, #tpu.memory_space<vmem>>, %arg3: memref<8x128xf32, #tpu.memory_space<vmem>>, %arg4: memref<8x1xf32, #tpu.memory_space<vmem>>) attributes {dimension_semantics = [#tpu.dimension_semantics<parallel>, #tpu.dimension_semantics<arbitrary>], iteration_bounds = array<i64: 1, 1>, scalar_prefetch = 0 : i64, scratch_operands = 0 : i64, tpu.core_type = #tpu.core_type<tc>, window_params = [{transform_indices = @transform_0, window_bounds = array<i64: 1, 128>}, {pipeline_mode = #tpu.pipeline_mode<synchronous>, transform_indices = @transform_1, window_bounds = array<i64: 8, 128>}, {transform_indices = @transform_2, window_bounds = array<i64: 8, 1>}]} {
    %c0 = arith.constant 0 : index
    %c0_0 = arith.constant 0 : index
    %0 = vector.load %arg2[%c0, %c0_0] : memref<1x128xf32, #tpu.memory_space<vmem>>, vector<1x128xf32>
    %1 = arith.mulf %0, %0 : vector<1x128xf32>
    %c0_1 = arith.constant 0 : index
    %c0_2 = arith.constant 0 : index
    %2 = vector.load %arg3[%c0_1, %c0_2] : memref<8x128xf32, #tpu.memory_space<vmem>>, vector<8x128xf32>
    %cst = arith.constant dense<0.000000e+00> : vector<8x1xf32>
    %3 = tpu.matmul %2, %1, %cst {dimension_numbers = #tpu.dot_dimension_numbers<[1], [1], [0], [0], [0, 0, 1, 0], [], []>} : vector<8x128xf32>, vector<1x128xf32>, vector<8x1xf32> -> vector<8x1xf32>
    %c0_3 = arith.constant 0 : index
    %c0_4 = arith.constant 0 : index
    %4 = vector.load %arg4[%c0_3, %c0_4] : memref<8x1xf32, #tpu.memory_space<vmem>>, vector<8x1xf32>
    tpu.vector_store %arg4[%c0_3, %c0_4], %3 {strides = array<i32>} : memref<8x1xf32, #tpu.memory_space<vmem>>, vector<8x1xf32>,
    return
  }
  func.func @transform_0(%arg0: i32, %arg1: i32) -> (i32, i32) {
    %c0_i32 = arith.constant 0 : i32
    return %arg0, %arg1 : i32, i32
  }
  func.func @transform_1(%arg0: i32, %arg1: i32) -> (i32, i32) {
    %c0_i32 = arith.constant 0 : i32
    %c0_i32_0 = arith.constant 0 : i32
    %c0_i32_1 = arith.constant 0 : i32
    return %c0_i32, %c0_i32_0 : i32, i32
  }
  func.func @transform_2(%arg0: i32, %arg1: i32) -> (i32, i32) {
    %c0_i32 = arith.constant 0 : i32
    %c0_i32_0 = arith.constant 0 : i32
    return %c0_i32, %arg0 : i32, i32
  }
}

</mosaic_0001>

<llo_original>
// kernel: tpu_custom_call.1
$region0: #{tpu_custom_call.1}
  #allocation0 [shape = 'u32[]', space=smem, size = 0x4, offset = 0x4, fixed_abs, tag = 'smem constant byte address 0x4 - core index']
  #allocation1 [shape = 'u32[72,128]{1,0:T(1,128)}', space=vmem, size = 0x9000, scoped, tag = 'internal scratch']
  %s0 = inlined_call_operand.hbm [shape: f32[1,128], index: 0, kind: input, shape index: {}]
  %s1 = inlined_call_operand.hbm [shape: f32[8,128], index: 1, kind: input, shape index: {}]
  %s2 = inlined_call_operand.vmem [shape: f32[8,1], index: 2, kind: output, shape index: {}]
  %s3 = sld [smem:[#allocation0]]
  $region26: #{tpu_custom_call.1} parent=0
    _
  %s5 = ssub.s32 1, %s3
  %s6 = scalar_select 0, %s5, %s3
  $region1: #{tpu_custom_call.1} parent=0
    #allocation2 [shape = 'u8[512]{0}', space=vmem, size = 0x400, scoped, tag = 'input window, operand 0, single buffered']
    #allocation3 [shape = 's32[1]{0}', space=sflag, size = 0x4, scoped, tag = 'scoped memory for tpu_custom_call.1']
    #allocation4 [shape = 'u8[4096]{0}', space=vmem, size = 0x1000, scoped, tag = 'input window, operand 1, single buffered']
    #allocation5 [shape = 's32[1]{0}', space=sflag, size = 0x4, scoped, tag = 'scoped memory for tpu_custom_call.1']
    %7 = vsyncpa [#allocation3], 0
    %8 = vsyncpa [#allocation5], 0
    // Predicated region
    $region2: #{tpu_custom_call.1} parent=1 // pred_check
      _
    $region3: #{tpu_custom_call.1} parent=1 // pred_check_branch
      %10 = sbr.rel (0) target = $region5
    $region4: #{tpu_custom_call.1} parent=1 // pred_region
      %12 = vsyncadd [#allocation3], 0
      %s14 = sshll.u32 %s0, 4
      %s15 = int_to_ptr.hbm [resolvable:$true] %s14
      %s16 = sshll.u32 [#allocation2], 4
      %s17 = int_to_ptr.vmem [resolvable:$true] %s16
      %19 = dma.hbm_to_vmem [thread:$0]  %s15, 16, %s17, [#allocation3]
    $region5: #{tpu_custom_call.1} parent=1 // pred_fallthru
      _
    // Predicated region
    $region6: #{tpu_custom_call.1} parent=1 // pred_check
      _
    $region7: #{tpu_custom_call.1} parent=1 // pred_check_branch
      %21 = sbr.rel (0) target = $region9
    $region8: #{tpu_custom_call.1} parent=1 // pred_region
      %23 = vsyncadd [#allocation5], 0
      %s25 = sshll.u32 %s1, 4
      %s26 = int_to_ptr.hbm [resolvable:$true] %s25
      %s27 = sshll.u32 [#allocation4], 4
      %s28 = int_to_ptr.vmem [resolvable:$true] %s27
      %30 = dma.hbm_to_vmem [thread:$0]  %s26, 128, %s28, [#allocation5]
    $region9: #{tpu_custom_call.1} parent=1 // pred_fallthru
      _
    // Predicated region
    $region10: #{tpu_custom_call.1} parent=1 // pred_check
      _
    $region11: #{tpu_custom_call.1} parent=1 // pred_check_branch
      %32 = sbr.rel (0) target = $region13
    $region12: #{tpu_custom_call.1} parent=1 // pred_region
      %34 = dma.done [#allocation3], 16
    $region13: #{tpu_custom_call.1} parent=1 // pred_fallthru
      _
    // Predicated region
    $region14: #{tpu_custom_call.1} parent=1 // pred_check
      _
    $region15: #{tpu_custom_call.1} parent=1 // pred_check_branch
      %36 = sbr.rel (0) target = $region17
    $region16: #{tpu_custom_call.1} parent=1 // pred_region
      %38 = dma.done [#allocation5], 128
    $region17: #{tpu_custom_call.1} parent=1 // pred_fallthru
      _
    %v39 = vld [vmem:[#allocation2] sm:$0x1]
    %v40 = vmul.f32 %v39, %v39
    %v41 = vld [vmem:[#allocation4] sm:$0xff]
    %v43 = vperm.slane %v40, 0
    %v45 = vmul.f32 %v41, %v43
    %46 = vadd.xlane.f32.xlu0 %v45
    %v47 = vpop.xlane.xlu0 %46
    %vm48 = vcmask 7168
    %49 = vst.msk [vmem:[%s2] sm:$0xff] %vm48, %v47
    // Predicated region
    $region18: #{tpu_custom_call.1} parent=1 // pred_check
      _
    $region19: #{tpu_custom_call.1} parent=1 // pred_check_branch
      %51 = sbr.rel (0) target = $region21
    $region20: #{tpu_custom_call.1} parent=1 // pred_region
      _
    $region21: #{tpu_custom_call.1} parent=1 // pred_fallthru
      _
    // Predicated region
    $region22: #{tpu_custom_call.1} parent=1 // pred_check
      _
    $region23: #{tpu_custom_call.1} parent=1 // pred_check_branch
      %53 = sbr.rel (0) target = $region25
    $region24: #{tpu_custom_call.1} parent=1 // pred_region
      _
    $region25: #{tpu_custom_call.1} parent=1 // pred_fallthru
      _
    %54 = vsyncpa [#allocation3], 1
    %55 = vsyncpa [#allocation5], 1

</llo_original>
